<compile_context>
chip_gen: v5e
topology: v5e:2x2
jax: 0.10.0
libtpu: 0.0.40
codegen_flags: <defaults>
</compile_context>

<pallas_src>
import math
import numpy as np

import jax
import jax.numpy as jnp
from jax.experimental import pallas as pl
from jax.experimental.pallas import tpu as pltpu


# ---------------- configuration (mirrors the PyTorch module __init__) -------
IN_FEATURES = 2          # point coordinates (x, y)
NUM_FREQ = 4             # args.ff_dims
SCALE = 2.0              # args.encoding_scale
PE_DIM = IN_FEATURES + IN_FEATURES * 2 * NUM_FREQ   # 2 + 2*2*4 = 18
DEPTH = 4
HIDDEN_DIM = 32
TOKEN_SIZE = 32

PACK = 4                          # points packed per 128-lane row
PACK_WIDTH = 32                   # lanes per packed point (PE padded to 32)
LANES = PACK * PACK_WIDTH         # 128

SIN_BASE = IN_FEATURES                           # lane 2 within a 32-lane block
COS_BASE = IN_FEATURES + NUM_FREQ * IN_FEATURES  # lane 10 within a 32-lane block

assert HIDDEN_DIM == PACK_WIDTH and TOKEN_SIZE == PACK_WIDTH and PE_DIM <= PACK_WIDTH


# ---------------------------- Pallas kernel ---------------------------------
def _mlp_kernel(coords_ref, spread_ref, pe_ref, w_ref, b_ref, out_ref):
    c = coords_ref[...]                                          # (tile, 8) f32

    # Pure 0/1 selector matmul: each lane of point-block p receives the raw
    # x_p or y_p coordinate.  Coefficients / phase are applied afterwards in
    # exact f32 on the VPU (tiny K=8 matmul; MXU has huge slack here).
    sel = jnp.dot(c, spread_ref[...], preferred_element_type=jnp.float32)

    coef = pe_ref[0:1, :]   # 1 on id lanes, pi*scale^i on sin/cos lanes, 0 on pad
    phase = pe_ref[1:2, :]  # pi/2 on cos lanes (cos(t) = sin(t + pi/2)), else 0
    idm = pe_ref[2:3, :]    # 1 on identity lanes
    trm = pe_ref[3:4, :]    # 1 on sin + cos lanes

    arg = sel * coef + phase
    # Whole positional encoding with a SINGLE sin (no cos) and no
    # iota/mod/compare/select chain; pad lanes are zeroed by the masks.
    x = arg * idm + jnp.sin(arg) * trm                           # (tile, 128) f32

    # 4 x (Linear -> ReLU): block-diagonal 128x128 bf16 weights, f32 acc,
    # bias add + ReLU in f32 (portable across v5e/v6e/v7x VPUs).
    for layer in range(DEPTH):
        y = jnp.dot(x.astype(jnp.bfloat16), w_ref[layer],
                    preferred_element_type=jnp.float32)
        x = jnp.maximum(y + b_ref[layer], 0.0)

    out_ref[...] = x.astype(out_ref.dtype)


# --------------------------- host-side param prep ----------------------------
def _pe_permutation():
    """kernel-lane order -> original PyTorch PE feature index."""
    perm = list(range(IN_FEATURES))
    for i in range(NUM_FREQ):                                        # sin block
        for j in range(IN_FEATURES):
            perm.append(IN_FEATURES + 2 * (i * IN_FEATURES + j))
    for i in range(NUM_FREQ):                                        # cos block
        for j in range(IN_FEATURES):
            perm.append(IN_FEATURES + 2 * (i * IN_FEATURES + j) + 1)
    return np.asarray(perm, np.int32)


def _make_spread():
    """(8, 128) pure 0/1 selector: packed coords row -> per-lane raw coordinate."""
    s = np.zeros((PACK * IN_FEATURES, LANES), np.float32)
    for p in range(PACK):
        base = p * PACK_WIDTH
        for j in range(IN_FEATURES):
            src = p * IN_FEATURES + j
            s[src, base + j] = 1.0                                   # identity lane
            for i in range(NUM_FREQ):
                s[src, base + SIN_BASE + i * IN_FEATURES + j] = 1.0  # sin lane
                s[src, base + COS_BASE + i * IN_FEATURES + j] = 1.0  # cos lane
    return jnp.asarray(s)


def _make_pe_consts():
    """(8, 128) constant rows: [coef, phase, id_mask, trig_mask, 0, 0, 0, 0]."""
    coef = np.zeros((LANES,), np.float32)
    phase = np.zeros((LANES,), np.float32)
    idm = np.zeros((LANES,), np.float32)
    trm = np.zeros((LANES,), np.float32)
    for p in range(PACK):
        base = p * PACK_WIDTH
        for j in range(IN_FEATURES):
            coef[base + j] = 1.0
            idm[base + j] = 1.0
            for i in range(NUM_FREQ):
                f = np.float32((SCALE ** i) * math.pi)
                ls = base + SIN_BASE + i * IN_FEATURES + j
                lc = base + COS_BASE + i * IN_FEATURES + j
                coef[ls] = f
                coef[lc] = f
                phase[lc] = np.float32(math.pi / 2.0)
                trm[ls] = 1.0
                trm[lc] = 1.0
    consts = np.zeros((8, LANES), np.float32)
    consts[0], consts[1], consts[2], consts[3] = coef, phase, idm, trm
    return jnp.asarray(consts)


def _pack_params(params):
    """[(W(in,out), b(1,out))] -> W_all (DEPTH,128,128) bf16, b_all (DEPTH,1,128) f32."""
    perm = _pe_permutation()
    ws, bs = [], []
    for li, (w, b) in enumerate(params):
        w = jnp.asarray(w, jnp.float32)
        if li == 0:
            w = w[perm, :]                                           # kernel PE lane order
            w = jnp.pad(w, ((0, PACK_WIDTH - PE_DIM), (0, 0)))       # (32, 32)
        wbd = jnp.kron(jnp.eye(PACK, dtype=jnp.float32), w)          # block-diag (128,128)
        ws.append(wbd.astype(jnp.bfloat16))
        bs.append(jnp.tile(jnp.asarray(b, jnp.float32).reshape(-1), PACK).reshape(1, LANES))
    return jnp.stack(ws), jnp.stack(bs)


# ------------------------------ wrapper --------------------------------------
def pointwise_position_mlp(coords, params, *, tile_rows=2048, out_dtype=jnp.float32):
    """coords: (..., 2).  params: list of (W(in,out), b(1,out)) for DEPTH layers."""
    lead_shape = coords.shape[:-1]
    m = int(math.prod(lead_shape)) if lead_shape else 1
    coords2d = coords.reshape(m, IN_FEATURES).astype(jnp.float32)

    # --- tiling over packed rows (4 points per 128-lane row) -----------------
    rows = pl.cdiv(m, PACK)
    tile = min(int(tile_rows), max(int(rows), 8))
    tile = ((tile + 7) // 8) * 8                     # sublane-aligned
    num_steps = pl.cdiv(rows, tile)
    rows_pad = num_steps * tile
    m_pad = rows_pad * PACK

    if m_pad != m:
        coords2d = jnp.pad(coords2d, ((0, m_pad - m), (0, 0)))
    coords_packed = coords2d.reshape(rows_pad, PACK * IN_FEATURES)   # (rows, 8)

    spread = _make_spread()
    pe_consts = _make_pe_consts()
    w_all, b_all = _pack_params(params)

    out = pl.pallas_call(
        _mlp_kernel,
        out_shape=jax.ShapeDtypeStruct((rows_pad, LANES), out_dtype),
        grid_spec=pltpu.PrefetchScalarGridSpec(
            num_scalar_prefetch=0,
            grid=(num_steps,),
            in_specs=[
                pl.BlockSpec((tile, PACK * IN_FEATURES), lambda i: (i, 0)),
                pl.BlockSpec(spread.shape, lambda i: (0, 0)),
                pl.BlockSpec(pe_consts.shape, lambda i: (0, 0)),
                pl.BlockSpec(w_all.shape, lambda i: (0, 0, 0)),
                pl.BlockSpec(b_all.shape, lambda i: (0, 0, 0)),
            ],
            out_specs=pl.BlockSpec((tile, LANES), lambda i: (i, 0)),
        ),
        compiler_params=pltpu.CompilerParams(
            dimension_semantics=("parallel",),
            vmem_limit_bytes=32 * 1024 * 1024),
    )(coords_packed, spread, pe_consts, w_all, b_all)

    # Unpack: (rows_pad, 128) -> (m, TOKEN_SIZE).  Row-major reshape is free;
    # the row slice (a second pass over the output) only happens when padding
    # was actually added.
    out = out.reshape(rows_pad * PACK, PACK_WIDTH)
    if m_pad != m:
        out = out[:m]
    return out.reshape(*lead_shape, TOKEN_SIZE)


# --------------------------- parameter init ----------------------------------
def init_params(key):
    """Xavier-normal weights (stored as (in, out)), zero biases."""
    dims = [PE_DIM] + [HIDDEN_DIM] * (DEPTH - 1) + [TOKEN_SIZE]
    params = []
    for li in range(DEPTH):
        fan_in, fan_out = dims[li], dims[li + 1]
        key, sub = jax.random.split(key)
        std = math.sqrt(2.0 / (fan_in + fan_out))
        w = jax.random.normal(sub, (fan_in, fan_out), jnp.float32) * std
        b = jnp.zeros((1, fan_out), jnp.float32)
        params.append((w, b))
    return params


# --------------------------- pure-JAX reference -------------------------------
def reference(coords, params):
    c = coords.astype(jnp.float32)
    feats = [c]
    for i in range(NUM_FREQ):
        for j in range(IN_FEATURES):
            cj = c[..., j:j + 1]
            arg = (SCALE ** i) * jnp.pi * cj
            feats.append(jnp.sin(arg))
            feats.append(jnp.cos(arg))
    x = jnp.concatenate(feats, axis=-1)
    for w, b in params:
        x = jnp.maximum(x @ w + b[0], 0.0)
    return x


# ------------------------------- main -----------------------------------------
if __name__ == "__main__":
    key = jax.random.PRNGKey(0)
    kp, kx1, kx2 = jax.random.split(key, 3)

    params = init_params(kp)

    # small input: batch=2, seq=8 points, 2 coords per point, in [-1, 1]
    coords = jax.random.uniform(kx1, (2, 8, IN_FEATURES), jnp.float32,
                                minval=-1.0, maxval=1.0)
    out = jax.block_until_ready(pointwise_position_mlp(coords, params))
    ref = reference(coords, params)
    assert out.shape == (2, 8, TOKEN_SIZE), out.shape
    # bf16 MXU weights -> loosened tolerance.
    assert jnp.allclose(out, ref, atol=2e-2, rtol=2e-2), \
        float(jnp.max(jnp.abs(out - ref)))

    # second shape: exercises row padding and the larger-tile path
    coords2 = jax.random.uniform(kx2, (3, 1000, IN_FEATURES), jnp.float32,
                                 minval=-1.0, maxval=1.0)
    out2 = jax.block_until_ready(pointwise_position_mlp(coords2, params))
    ref2 = reference(coords2, params)
    assert out2.shape == (3, 1000, TOKEN_SIZE), out2.shape
    assert jnp.allclose(out2, ref2, atol=2e-2, rtol=2e-2), \
        float(jnp.max(jnp.abs(out2 - ref2)))

    print("KERNEL_OK")
</pallas_src>

<mosaic_0001>
module attributes {stable_mosaic.version = 11 : i64} {
  func.func @_mlp_kernel(%arg0: i32, %arg1: memref<8x8xf32, #tpu.memory_space<vmem>>, %arg2: memref<8x128xf32, #tpu.memory_space<vmem>>, %arg3: memref<8x128xf32, #tpu.memory_space<vmem>>, %arg4: memref<4x128x128xbf16, #tpu.memory_space<vmem>>, %arg5: memref<4x1x128xf32, #tpu.memory_space<vmem>>, %arg6: memref<8x128xf32, #tpu.memory_space<vmem>>) attributes {dimension_semantics = [#tpu.dimension_semantics<parallel>], iteration_bounds = array<i64: 1>, scalar_prefetch = 0 : i64, scratch_operands = 0 : i64, tpu.core_type = #tpu.core_type<tc>, window_params = [{transform_indices = @transform_0, window_bounds = array<i64: 8, 8>}, {pipeline_mode = #tpu.pipeline_mode<synchronous>, transform_indices = @transform_1, window_bounds = array<i64: 8, 128>}, {pipeline_mode = #tpu.pipeline_mode<synchronous>, transform_indices = @transform_2, window_bounds = array<i64: 8, 128>}, {pipeline_mode = #tpu.pipeline_mode<synchronous>, transform_indices = @transform_3, window_bounds = array<i64: 4, 128, 128>}, {pipeline_mode = #tpu.pipeline_mode<synchronous>, transform_indices = @transform_4, window_bounds = array<i64: 4, 1, 128>}, {transform_indices = @transform_5, window_bounds = array<i64: 8, 128>}]} {
    %c0 = arith.constant 0 : index
    %c0_0 = arith.constant 0 : index
    %0 = vector.load %arg1[%c0, %c0_0] : memref<8x8xf32, #tpu.memory_space<vmem>>, vector<8x8xf32>
    %c0_1 = arith.constant 0 : index
    %c0_2 = arith.constant 0 : index
    %1 = vector.load %arg2[%c0_1, %c0_2] : memref<8x128xf32, #tpu.memory_space<vmem>>, vector<8x128xf32>
    %cst = arith.constant dense<0.000000e+00> : vector<8x128xf32>
    %2 = tpu.matmul %0, %1, %cst {dimension_numbers = #tpu.dot_dimension_numbers<[1], [0], [0], [1], [0, 0, 1, 1], [], []>} : vector<8x8xf32>, vector<8x128xf32>, vector<8x128xf32> -> vector<8x128xf32>
    %c0_3 = arith.constant 0 : index
    %c0_4 = arith.constant 0 : index
    %3 = vector.load %arg3[%c0_3, %c0_4] : memref<8x128xf32, #tpu.memory_space<vmem>>, vector<1x128xf32>
    %c1 = arith.constant 1 : index
    %c0_5 = arith.constant 0 : index
    %4 = vector.load %arg3[%c1, %c0_5] : memref<8x128xf32, #tpu.memory_space<vmem>>, vector<1x128xf32>
    %c2 = arith.constant 2 : index
    %c0_6 = arith.constant 0 : index
    %5 = vector.load %arg3[%c2, %c0_6] : memref<8x128xf32, #tpu.memory_space<vmem>>, vector<1x128xf32>
    %c3 = arith.constant 3 : index
    %c0_7 = arith.constant 0 : index
    %6 = vector.load %arg3[%c3, %c0_7] : memref<8x128xf32, #tpu.memory_space<vmem>>, vector<1x128xf32>
    %7 = vector.broadcast %3 : vector<1x128xf32> to vector<8x128xf32>
    %8 = arith.mulf %2, %7 : vector<8x128xf32>
    %9 = vector.broadcast %4 : vector<1x128xf32> to vector<8x128xf32>
    %10 = arith.addf %8, %9 : vector<8x128xf32>
    %11 = vector.broadcast %5 : vector<1x128xf32> to vector<8x128xf32>
    %12 = arith.mulf %10, %11 : vector<8x128xf32>
    %13 = math.sin %10 : vector<8x128xf32>
    %14 = vector.broadcast %6 : vector<1x128xf32> to vector<8x128xf32>
    %15 = arith.mulf %13, %14 : vector<8x128xf32>
    %16 = arith.addf %12, %15 : vector<8x128xf32>
    %17 = arith.truncf %16 : vector<8x128xf32> to vector<8x128xbf16>
    %c0_8 = arith.constant 0 : index
    %c0_9 = arith.constant 0 : index
    %c0_10 = arith.constant 0 : index
    %18 = vector.load %arg4[%c0_8, %c0_9, %c0_10] : memref<4x128x128xbf16, #tpu.memory_space<vmem>>, vector<1x128x128xbf16>
    %19 = vector.shape_cast %18 : vector<1x128x128xbf16> to vector<128x128xbf16>
    %cst_11 = arith.constant dense<0.000000e+00> : vector<8x128xf32>
    %20 = tpu.matmul %17, %19, %cst_11 {dimension_numbers = #tpu.dot_dimension_numbers<[1], [0], [0], [1], [0, 0, 1, 1], [], []>} : vector<8x128xbf16>, vector<128x128xbf16>, vector<8x128xf32> -> vector<8x128xf32>
    %c0_12 = arith.constant 0 : index
    %c0_13 = arith.constant 0 : index
    %c0_14 = arith.constant 0 : index
    %21 = vector.load %arg5[%c0_12, %c0_13, %c0_14] : memref<4x1x128xf32, #tpu.memory_space<vmem>>, vector<1x1x128xf32>
    %22 = vector.shape_cast %21 : vector<1x1x128xf32> to vector<1x128xf32>
    %23 = vector.broadcast %22 : vector<1x128xf32> to vector<8x128xf32>
    %24 = arith.addf %20, %23 : vector<8x128xf32>
    %cst_15 = arith.constant 0.000000e+00 : f32
    %25 = vector.broadcast %cst_15 : f32 to vector<8x128xf32>
    %26 = arith.maximumf %24, %25 : vector<8x128xf32>
    %27 = arith.truncf %26 : vector<8x128xf32> to vector<8x128xbf16>
    %c1_16 = arith.constant 1 : index
    %c0_17 = arith.constant 0 : index
    %c0_18 = arith.constant 0 : index
    %28 = vector.load %arg4[%c1_16, %c0_17, %c0_18] : memref<4x128x128xbf16, #tpu.memory_space<vmem>>, vector<1x128x128xbf16>
    %29 = vector.shape_cast %28 : vector<1x128x128xbf16> to vector<128x128xbf16>
    %cst_19 = arith.constant dense<0.000000e+00> : vector<8x128xf32>
    %30 = tpu.matmul %27, %29, %cst_19 {dimension_numbers = #tpu.dot_dimension_numbers<[1], [0], [0], [1], [0, 0, 1, 1], [], []>} : vector<8x128xbf16>, vector<128x128xbf16>, vector<8x128xf32> -> vector<8x128xf32>
    %c1_20 = arith.constant 1 : index
    %c0_21 = arith.constant 0 : index
    %c0_22 = arith.constant 0 : index
    %31 = vector.load %arg5[%c1_20, %c0_21, %c0_22] : memref<4x1x128xf32, #tpu.memory_space<vmem>>, vector<1x1x128xf32>
    %32 = vector.shape_cast %31 : vector<1x1x128xf32> to vector<1x128xf32>
    %33 = vector.broadcast %32 : vector<1x128xf32> to vector<8x128xf32>
    %34 = arith.addf %30, %33 : vector<8x128xf32>
    %cst_23 = arith.constant 0.000000e+00 : f32
    %35 = vector.broadcast %cst_23 : f32 to vector<8x128xf32>
    %36 = arith.maximumf %34, %35 : vector<8x128xf32>
    %37 = arith.truncf %36 : vector<8x128xf32> to vector<8x128xbf16>
    %c2_24 = arith.constant 2 : index
    %c0_25 = arith.constant 0 : index
    %c0_26 = arith.constant 0 : index
    %38 = vector.load %arg4[%c2_24, %c0_25, %c0_26] : memref<4x128x128xbf16, #tpu.memory_space<vmem>>, vector<1x128x128xbf16>
    %39 = vector.shape_cast %38 : vector<1x128x128xbf16> to vector<128x128xbf16>
    %cst_27 = arith.constant dense<0.000000e+00> : vector<8x128xf32>
    %40 = tpu.matmul %37, %39, %cst_27 {dimension_numbers = #tpu.dot_dimension_numbers<[1], [0], [0], [1], [0, 0, 1, 1], [], []>} : vector<8x128xbf16>, vector<128x128xbf16>, vector<8x128xf32> -> vector<8x128xf32>
    %c2_28 = arith.constant 2 : index
    %c0_29 = arith.constant 0 : index
    %c0_30 = arith.constant 0 : index
    %41 = vector.load %arg5[%c2_28, %c0_29, %c0_30] : memref<4x1x128xf32, #tpu.memory_space<vmem>>, vector<1x1x128xf32>
    %42 = vector.shape_cast %41 : vector<1x1x128xf32> to vector<1x128xf32>
    %43 = vector.broadcast %42 : vector<1x128xf32> to vector<8x128xf32>
    %44 = arith.addf %40, %43 : vector<8x128xf32>
    %cst_31 = arith.constant 0.000000e+00 : f32
    %45 = vector.broadcast %cst_31 : f32 to vector<8x128xf32>
    %46 = arith.maximumf %44, %45 : vector<8x128xf32>
    %47 = arith.truncf %46 : vector<8x128xf32> to vector<8x128xbf16>
    %c3_32 = arith.constant 3 : index
    %c0_33 = arith.constant 0 : index
    %c0_34 = arith.constant 0 : index
    %48 = vector.load %arg4[%c3_32, %c0_33, %c0_34] : memref<4x128x128xbf16, #tpu.memory_space<vmem>>, vector<1x128x128xbf16>
    %49 = vector.shape_cast %48 : vector<1x128x128xbf16> to vector<128x128xbf16>
    %cst_35 = arith.constant dense<0.000000e+00> : vector<8x128xf32>
    %50 = tpu.matmul %47, %49, %cst_35 {dimension_numbers = #tpu.dot_dimension_numbers<[1], [0], [0], [1], [0, 0, 1, 1], [], []>} : vector<8x128xbf16>, vector<128x128xbf16>, vector<8x128xf32> -> vector<8x128xf32>
    %c3_36 = arith.constant 3 : index
    %c0_37 = arith.constant 0 : index
    %c0_38 = arith.constant 0 : index
    %51 = vector.load %arg5[%c3_36, %c0_37, %c0_38] : memref<4x1x128xf32, #tpu.memory_space<vmem>>, vector<1x1x128xf32>
    %52 = vector.shape_cast %51 : vector<1x1x128xf32> to vector<1x128xf32>
    %53 = vector.broadcast %52 : vector<1x128xf32> to vector<8x128xf32>
    %54 = arith.addf %50, %53 : vector<8x128xf32>
    %cst_39 = arith.constant 0.000000e+00 : f32
    %55 = vector.broadcast %cst_39 : f32 to vector<8x128xf32>
    %56 = arith.maximumf %54, %55 : vector<8x128xf32>
    %c0_40 = arith.constant 0 : index
    %c0_41 = arith.constant 0 : index
    %57 = vector.load %arg6[%c0_40, %c0_41] : memref<8x128xf32, #tpu.memory_space<vmem>>, vector<8x128xf32>
    tpu.vector_store %arg6[%c0_40, %c0_41], %56 {strides = array<i32>} : memref<8x128xf32, #tpu.memory_space<vmem>>, vector<8x128xf32>,
    return
  }
  func.func @transform_0(%arg0: i32) -> (i32, i32) {
    %c0_i32 = arith.constant 0 : i32
    %c0_i32_0 = arith.constant 0 : i32
    return %arg0, %c0_i32 : i32, i32
  }
  func.func @transform_1(%arg0: i32) -> (i32, i32) {
    %c0_i32 = arith.constant 0 : i32
    %c0_i32_0 = arith.constant 0 : i32
    %c0_i32_1 = arith.constant 0 : i32
    return %c0_i32, %c0_i32_0 : i32, i32
  }
  func.func @transform_2(%arg0: i32) -> (i32, i32) {
    %c0_i32 = arith.constant 0 : i32
    %c0_i32_0 = arith.constant 0 : i32
    %c0_i32_1 = arith.constant 0 : i32
    return %c0_i32, %c0_i32_0 : i32, i32
  }
  func.func @transform_3(%arg0: i32) -> (i32, i32, i32) {
    %c0_i32 = arith.constant 0 : i32
    %c0_i32_0 = arith.constant 0 : i32
    %c0_i32_1 = arith.constant 0 : i32
    %c0_i32_2 = arith.constant 0 : i32
    return %c0_i32, %c0_i32_0, %c0_i32_1 : i32, i32, i32
  }
  func.func @transform_4(%arg0: i32) -> (i32, i32, i32) {
    %c0_i32 = arith.constant 0 : i32
    %c0_i32_0 = arith.constant 0 : i32
    %c0_i32_1 = arith.constant 0 : i32
    %c0_i32_2 = arith.constant 0 : i32
    return %c0_i32, %c0_i32_0, %c0_i32_1 : i32, i32, i32
  }
  func.func @transform_5(%arg0: i32) -> (i32, i32) {
    %c0_i32 = arith.constant 0 : i32
    %c0_i32_0 = arith.constant 0 : i32
    return %arg0, %c0_i32 : i32, i32
  }
}

</mosaic_0001>

<llo_original>
// kernel: tpu_custom_call.1
$region0: #{tpu_custom_call.1}
  #allocation0 [shape = 'u32[]', space=smem, size = 0x4, offset = 0x4, fixed_abs, tag = 'smem constant byte address 0x4 - core index']
  #allocation1 [shape = 'u32[72,128]{1,0:T(1,128)}', space=vmem, size = 0x9000, scoped, tag = 'internal scratch']
  %s0 = inlined_call_operand.hbm [shape: f32[8,8], index: 0, kind: input, shape index: {}]
  %s1 = inlined_call_operand.hbm [shape: f32[8,128], index: 1, kind: input, shape index: {}]
  %s2 = inlined_call_operand.hbm [shape: f32[8,128], index: 2, kind: input, shape index: {}]
  %s3 = inlined_call_operand.hbm [shape: bf16[4,128,128], index: 3, kind: input, shape index: {}]
  %s4 = inlined_call_operand.hbm [shape: f32[4,1,128], index: 4, kind: input, shape index: {}]
  %s5 = inlined_call_operand.hbm [shape: f32[8,128], index: 5, kind: output, shape index: {}]
  %s6 = sld [smem:[#allocation0]]
  $region50: #{tpu_custom_call.1} parent=0
    _
  %s8 = ssub.s32 1, %s6
  %s9 = scalar_select 0, %s8, %s6
  $region1: #{tpu_custom_call.1} parent=0
    #allocation2 [shape = 'u8[4096]{0}', space=vmem, size = 0x1000, scoped, tag = 'input window, operand 0, single buffered']
    #allocation3 [shape = 's32[1]{0}', space=sflag, size = 0x4, scoped, tag = 'scoped memory for tpu_custom_call.1']
    #allocation4 [shape = 's32[1]{0}', space=sflag, size = 0x4, scoped, tag = 'scoped memory for tpu_custom_call.1']
    #allocation5 [shape = 'u8[4096]{0}', space=vmem, size = 0x1000, scoped, tag = 'input window, operand 1, single buffered']
    #allocation6 [shape = 's32[1]{0}', space=sflag, size = 0x4, scoped, tag = 'scoped memory for tpu_custom_call.1']
    #allocation7 [shape = 'u8[4096]{0}', space=vmem, size = 0x1000, scoped, tag = 'input window, operand 2, single buffered']
    #allocation8 [shape = 'u8[131072]{0}', space=vmem, size = 0x20000, scoped, tag = 'input window, operand 3, single buffered']
    #allocation9 [shape = 's32[1]{0}', space=sflag, size = 0x4, scoped, tag = 'scoped memory for tpu_custom_call.1']
    #allocation10 [shape = 'u8[2048]{0}', space=vmem, size = 0x800, scoped, tag = 'input window, operand 4, single buffered']
    #allocation11 [shape = 'u8[4096]{0}', space=vmem, size = 0x1000, scoped, tag = 'output window, operand 0, single buffered']
    %10 = vsyncpa [#allocation3], 0
    %11 = vsyncpa [#allocation6], 0
    %12 = vsyncpa [#allocation9], 0
    %13 = vsyncpa [#allocation4], 0
    // Predicated region
    $region2: #{tpu_custom_call.1} parent=1 // pred_check
      _
    $region3: #{tpu_custom_call.1} parent=1 // pred_check_branch
      %15 = sbr.rel (0) target = $region5
    $region4: #{tpu_custom_call.1} parent=1 // pred_region
      %17 = vsyncadd [#allocation3], 0
      %s19 = sshll.u32 %s0, 4
      %s20 = int_to_ptr.hbm [resolvable:$true] %s19
      %s21 = sshll.u32 [#allocation2], 4
      %s22 = int_to_ptr.vmem [resolvable:$true] %s21
      %24 = dma.hbm_to_vmem [thread:$0]  %s20, 128, %s22, [#allocation3]
    $region5: #{tpu_custom_call.1} parent=1 // pred_fallthru
      _
    // Predicated region
    $region6: #{tpu_custom_call.1} parent=1 // pred_check
      _
    $region7: #{tpu_custom_call.1} parent=1 // pred_check_branch
      %26 = sbr.rel (0) target = $region9
    $region8: #{tpu_custom_call.1} parent=1 // pred_region
      %28 = vsyncadd [#allocation6], 0
      %s30 = sshll.u32 %s1, 4
      %s31 = int_to_ptr.hbm [resolvable:$true] %s30
      %s32 = sshll.u32 [#allocation5], 4
      %s33 = int_to_ptr.vmem [resolvable:$true] %s32
      %35 = dma.hbm_to_vmem [thread:$0]  %s31, 128, %s33, [#allocation6]
    $region9: #{tpu_custom_call.1} parent=1 // pred_fallthru
      _
    // Predicated region
    $region10: #{tpu_custom_call.1} parent=1 // pred_check
      _
    $region11: #{tpu_custom_call.1} parent=1 // pred_check_branch
      %37 = sbr.rel (0) target = $region13
    $region12: #{tpu_custom_call.1} parent=1 // pred_region
      %39 = vsyncadd [#allocation6], 0
      %s41 = sshll.u32 %s2, 4
      %s42 = int_to_ptr.hbm [resolvable:$true] %s41
      %s43 = sshll.u32 [#allocation7], 4
      %s44 = int_to_ptr.vmem [resolvable:$true] %s43
      %46 = dma.hbm_to_vmem [thread:$0]  %s42, 128, %s44, [#allocation6]
    $region13: #{tpu_custom_call.1} parent=1 // pred_fallthru
      _
    // Predicated region
    $region14: #{tpu_custom_call.1} parent=1 // pred_check
      _
    $region15: #{tpu_custom_call.1} parent=1 // pred_check_branch
      %48 = sbr.rel (0) target = $region17
    $region16: #{tpu_custom_call.1} parent=1 // pred_region
      %50 = vsyncadd [#allocation9], 0
      %s51 = sshll.u32 %s3, 4
      %s52 = int_to_ptr.hbm [resolvable:$true] %s51
      %s53 = sshll.u32 [#allocation8], 4
      %s54 = int_to_ptr.vmem [resolvable:$true] %s53
      %59 = dma.hbm_to_vmem [thread:$0]  %s52, 4096, %s54, [#allocation9], 64, 64, 4
    $region17: #{tpu_custom_call.1} parent=1 // pred_fallthru
      _
    // Predicated region
    $region18: #{tpu_custom_call.1} parent=1 // pred_check
      _
    $region19: #{tpu_custom_call.1} parent=1 // pred_check_branch
      %61 = sbr.rel (0) target = $region21
    $region20: #{tpu_custom_call.1} parent=1 // pred_region
      %63 = vsyncadd [#allocation9], 0
      %s64 = sshll.u32 %s4, 4
      %s65 = int_to_ptr.hbm [resolvable:$true] %s64
      %s66 = sshll.u32 [#allocation10], 4
      %s67 = int_to_ptr.vmem [resolvable:$true] %s66
      %72 = dma.hbm_to_vmem [thread:$0]  %s65, 64, %s67, [#allocation9], 16, 16, 1
    $region21: #{tpu_custom_call.1} parent=1 // pred_fallthru
      _
    // Predicated region
    $region22: #{tpu_custom_call.1} parent=1 // pred_check
      _
    $region23: #{tpu_custom_call.1} parent=1 // pred_check_branch
      %74 = sbr.rel (0) target = $region25
    $region24: #{tpu_custom_call.1} parent=1 // pred_region
      %76 = dma.done [#allocation3], 128
    $region25: #{tpu_custom_call.1} parent=1 // pred_fallthru
      _
    // Predicated region
    $region26: #{tpu_custom_call.1} parent=1 // pred_check
      _
    $region27: #{tpu_custom_call.1} parent=1 // pred_check_branch
      %78 = sbr.rel (0) target = $region29
    $region28: #{tpu_custom_call.1} parent=1 // pred_region
      %80 = dma.done [#allocation6], 128
    $region29: #{tpu_custom_call.1} parent=1 // pred_fallthru
      _
    // Predicated region
    $region30: #{tpu_custom_call.1} parent=1 // pred_check
      _
    $region31: #{tpu_custom_call.1} parent=1 // pred_check_branch
      %82 = sbr.rel (0) target = $region33
    $region32: #{tpu_custom_call.1} parent=1 // pred_region
      %84 = dma.done [#allocation6], 128
    $region33: #{tpu_custom_call.1} parent=1 // pred_fallthru
      _
    // Predicated region
    $region34: #{tpu_custom_call.1} parent=1 // pred_check
      _
    $region35: #{tpu_custom_call.1} parent=1 // pred_check_branch
      %86 = sbr.rel (0) target = $region37
    $region36: #{tpu_custom_call.1} parent=1 // pred_region
      %88 = dma.done [#allocation9], 4096
    $region37: #{tpu_custom_call.1} parent=1 // pred_fallthru
      _
    // Predicated region
    $region38: #{tpu_custom_call.1} parent=1 // pred_check
      _
    $region39: #{tpu_custom_call.1} parent=1 // pred_check_branch
      %90 = sbr.rel (0) target = $region41
    $region40: #{tpu_custom_call.1} parent=1 // pred_region
      %92 = dma.done [#allocation9], 64
    $region41: #{tpu_custom_call.1} parent=1 // pred_fallthru
      _
    %v93 = vld [vmem:[#allocation2] sm:$0xff]
    %v94 = vld [vmem:[#allocation5] sm:$0xff]
    %vm95 = vcmask 64512
    %v97 = vsel %vm95, %v93, 0
    %99 = vmatpush.msra.mxu0 0.0
    %100 = vmatpush.msra.mxu0 0.0
    %101 = vmatpush.msra.mxu0 0.0
    %102 = vmatpush.msra.mxu0 0.0
    %103 = vmatpush.msra.mxu0 0.0
    %104 = vmatpush.msra.mxu0 0.0
    %105 = vmatpush.msra.mxu0 0.0
    %106 = vmatpush.msra.mxu0 0.0
    %107 = vmatpush.msra.mxu0 0.0
    %108 = vmatpush.msra.mxu0 0.0
    %109 = vmatpush.msra.mxu0 0.0
    %110 = vmatpush.msra.mxu0 0.0
    %111 = vmatpush.msra.mxu0 0.0
    %112 = vmatpush.msra.mxu0 0.0
    %113 = vmatpush.msra.mxu0 0.0
    %114 = vmatpush.msra.mxu0 %v94
    %115 = vmatmul.f32.gmra.mxu0 %v97
    %v116 = vpop.f32.mrf.mxu0
    %v117 = vadd.f32 0.0, %v116
    %118 = vdwg.mxu0
    %v119 = vld [vmem:[#allocation7] sm:$0x1]
    %v120 = vld [vmem:[#allocation7 + $0x1] sm:$0x1]
    %v121 = vld [vmem:[#allocation7 + $0x2] sm:$0x1]
    %v122 = vld [vmem:[#allocation7 + $0x3] sm:$0x1]
    %v123 = vperm.slane %v119, 0
    %v124 = vmul.f32 %v117, %v123
    %v125 = vperm.slane %v120, 0
    %v126 = vadd.f32 %v124, %v125
    %v127 = vperm.slane %v121, 0
    %v128 = vmul.f32 %v126, %v127
    %v129 = vand.u32 2147483647, %v126
    %vm130 = vcmp.le.f32.partialorder %v129, 0.7853982
    %vm131 = vcmp.lt.s32.totalorder %v126, 0
    %v132 = vand.u32 %v126, 2139095040
    %v133 = vshrl.u32 %v132, 23
    %v134 = vsub.s32 %v133, 127
    %v135 = vand.u32 2147483647, %v126
    %v136 = vand.u32 %v135, 8388607
    %v137 = vor.u32 %v136, 8388608
    %v138 = vsub.s32 0, %v137
    %v139 = vadd.s32 %v134, 1
    %vm140 = vcmp.gt.s32.totalorder %v139, 0
    %v141 = vsel %vm140, %v139, 0
    %v142 = vshrl.u32 %v141, 5
    %v143 = vand.u32 %v141, 31
    %v144 = vsub.s32 32, %v143
    %v145 = vshrl.u32 683565275, %v144
    %v146 = vshll.u32 683565275, %v143
    %v147 = vshrl.u32 2475754826, %v144
    %v148 = vor.u32 %v146, %v147
    %v149 = vshll.u32 2475754826, %v143
    %v150 = vshrl.u32 2131351028, %v144
    %v151 = vor.u32 %v149, %v150
    %v152 = vshll.u32 2131351028, %v143
    %v153 = vshrl.u32 2102212464, %v144
    %v154 = vor.u32 %v152, %v153
    %v155 = vshll.u32 2102212464, %v143
    %v156 = vshrl.u32 920167782, %v144
    %v157 = vor.u32 %v155, %v156
    %v158 = vshll.u32 920167782, %v143
    %v159 = vshrl.u32 1326507024, %v144
    %v160 = vor.u32 %v158, %v159
    %vm161 = vcmp.lt.s32.totalorder %v142, 1
    %vm162 = vcmp.lt.s32.totalorder %v142, 2
    %vm163 = vcmp.lt.s32.totalorder %v142, 3
    %vm164 = vcmp.lt.s32.totalorder %v142, 4
    %v165 = vsel %vm161, %v145, %v148
    %v166 = vsel %vm164, %v154, 2102212464
    %v167 = vsel %vm163, %v151, %v166
    %v168 = vsel %vm162, %v165, %v167
    %v169 = vsel %vm161, %v148, %v151
    %v170 = vsel %vm164, %v157, 920167782
    %v171 = vsel %vm163, %v154, %v170
    %v172 = vsel %vm162, %v169, %v171
    %v173 = vsel %vm161, %v151, %v154
    %v174 = vsel %vm164, %v160, 1326507024
    %v175 = vsel %vm163, %v157, %v174
    %v176 = vsel %vm162, %v173, %v175
    %v177 = vshll.u32 %v137, 8
    %v178 = vand.u32 %v177, 65535
    %v179 = vshrl.u32 %v177, 16
    %v180 = vand.u32 %v176, 65535
    %v181 = vshrl.u32 %v176, 16
    %v182 = vmul.u32 %v178, %v180
    %v183 = vmul.u32 %v178, %v181
    %v184 = vmul.u32 %v179, %v180
    %v185 = vmul.u32 %v179, %v181
    %v186 = vshll.u32 %v183, 16
    %v187 = vshrl.u32 %v183, 16
    %v188 = vshll.u32 %v184, 16
    %v189 = vshrl.u32 %v184, 16
    %vm190 = vc.u32 %v182, %v186
    %v191 = vsel %vm190, 1, 0
    %v192 = vadd.s32 %v182, %v186
    %v193 = vadd.s32 %v185, %v191
    %vm194 = vc.u32 %v192, %v188
    %v195 = vsel %vm194, 1, 0
    %v196 = vadd.s32 %v192, %v188
    %v197 = vadd.s32 %v193, %v195
    %v198 = vadd.s32 %v197, %v187
    %v199 = vadd.s32 %v198, %v189
    %v200 = vand.u32 %v177, 65535
    %v201 = vshrl.u32 %v177, 16
    %v202 = vand.u32 %v172, 65535
    %v203 = vshrl.u32 %v172, 16
    %v204 = vmul.u32 %v200, %v202
    %v205 = vmul.u32 %v200, %v203
    %v206 = vmul.u32 %v201, %v202
    %v207 = vmul.u32 %v201, %v203
    %v208 = vshll.u32 %v205, 16
    %v209 = vshrl.u32 %v205, 16
    %v210 = vshll.u32 %v206, 16
    %v211 = vshrl.u32 %v206, 16
    %vm212 = vc.u32 %v204, %v208
    %v213 = vsel %vm212, 1, 0
    %v214 = vadd.s32 %v204, %v208
    %v215 = vadd.s32 %v207, %v213
    %vm216 = vc.u32 %v214, %v210
    %v217 = vsel %vm216, 1, 0
    %v218 = vadd.s32 %v214, %v210
    %v219 = vadd.s32 %v215, %v217
    %v220 = vadd.s32 %v219, %v209
    %v221 = vadd.s32 %v220, %v211
    %v222 = vmul.u32 %v177, %v168
    %v223 = vadd.s32 %v199, %v218
    %vm224 = vc.u32 %v199, %v218
    %v225 = vadd.s32 %v221, 1
    %v226 = vsel %vm224, %v225, %v221
    %v227 = vadd.s32 %v222, %v226
    %v228 = vadd.s32 %v227, 536870912
    %v229 = vshrl.u32 %v228, 30
    %v230 = vshll.u32 %v229, 30
    %v231 = vsub.s32 %v227, %v230
    %vm232 = vcmp.lt.s32.totalorder %v231, 0
    %v233 = vsub.s32 0, %v231
    %v234 = vsel %vm232, %v233, %v231
    %v235 = vclz %v234
    %v236 = vsub.s32 %v235, 2
    %vm237 = vcmp.gt.s32.totalorder 0, %v236
    %v238 = vsel %vm237, 0, %v236
    %v239 = vsub.s32 32, %v238
    %v240 = vshll.u32 %v231, %v238
    %v241 = vshrl.u32 %v223, %v239
    %v242 = vor.u32 %v240, %v241
    %v243 = vsub.s32 4294967266, %v238
    %v244 = vadd.s32 %v243, 127
    %v245 = vshll.u32 %v244, 23
    %v246 = vor.u32 4788187, %v245
    %v247 = vand.u32 2147483647, %v246
    %v249 = vcvt.s32.f32 %v242
    %v250 = vmul.f32 %v249, %v247
    %v251 = vxor.u32 %v250, 2147483648
    %v252 = vsel %vm131, %v251, %v250
    %v253 = vsub.s32 4, %v229
    %v254 = vsel %vm131, %v253, %v229
    %v255 = vsel %vm130, %v126, %v252
    %v256 = vsel %vm130, 0, %v254
    %v257 = vmul.f32 %v255, %v255
    %v258 = vmul.f32 %v257, -0.001358992
    %v259 = vadd.f32 %v258, 0.041655596
    %v260 = vmul.f32 %v257, %v259
    %v261 = vadd.f32 %v260, -0.4999988
    %v262 = vmul.f32 %v257, %v261
    %v263 = vadd.f32 1.0, %v262
    %v264 = vmul.f32 %v255, %v255
    %v265 = vmul.f32 %v264, -0.00019511016
    %v266 = vadd.f32 %v265, 0.008332121
    %v267 = vmul.f32 %v264, %v266
    %v268 = vadd.f32 %v267, -0.16666654
    %v269 = vmul.f32 %v264, %v268
    %v270 = vadd.f32 %v269, 1.0
    %v271 = vmul.f32 %v270, %v255
    %vm272 = vweird.f32 %v126
    %v273 = vadd.s32 %v256, 3
    %v274 = vand.u32 %v273, 3
    %vm275 = vcmp.lt.s32.totalorder %v274, 2
    %vm276 = vcmp.eq.s32.totalorder %v274, 0
    %v277 = vxor.u32 %v271, 2147483648
    %v278 = vsel %vm276, %v263, %v277
    %vm279 = vcmp.eq.s32.totalorder %v274, 2
    %v280 = vxor.u32 %v263, 2147483648
    %v281 = vsel %vm279, %v280, %v271
    %v282 = vsel %vm275, %v278, %v281
    %v283 = vsel %vm272, nan, %v282
    %v284 = vperm.slane %v122, 0
    %v285 = vmul.f32 %v283, %v284
    %v286 = vadd.f32 %v128, %v285
    %v287 = vpack.c.bf16 %v286, %v286
    %v288 = vld [vmem:[#allocation8] sm:$0xf]
    %v289 = vld [vmem:[#allocation8 + $0x4] sm:$0xf]
    %v290 = vld [vmem:[#allocation8 + $0x8] sm:$0xf]
    %v291 = vld [vmem:[#allocation8 + $0xc] sm:$0xf]
    %v292 = vld [vmem:[#allocation8 + $0x10] sm:$0xf]
    %v293 = vld [vmem:[#allocation8 + $0x14] sm:$0xf]
    %v294 = vld [vmem:[#allocation8 + $0x18] sm:$0xf]
    %v295 = vld [vmem:[#allocation8 + $0x1c] sm:$0xf]
    %v296 = vld [vmem:[#allocation8 + $0x20] sm:$0xf]
    %v297 = vld [vmem:[#allocation8 + $0x24] sm:$0xf]
    %v298 = vld [vmem:[#allocation8 + $0x28] sm:$0xf]
    %v299 = vld [vmem:[#allocation8 + $0x2c] sm:$0xf]
    %v300 = vld [vmem:[#allocation8 + $0x30] sm:$0xf]
    %v301 = vld [vmem:[#allocation8 + $0x34] sm:$0xf]
    %v302 = vld [vmem:[#allocation8 + $0x38] sm:$0xf]
    %v303 = vld [vmem:[#allocation8 + $0x3c] sm:$0xf]
    %v304 = vld [vmem:[#allocation10] sm:$0x1]
    %v306 = vperm.slane %v304, 0
    %v324 = vunpack.c.l.b16 %v288
    %v325 = vunpack.c.l.b16 %v289
    %v326 = vunpack.c.l.b16 %v290
    %v327 = vunpack.c.l.b16 %v291
    %v328 = vunpack.c.l.b16 %v292
    %v329 = vunpack.c.l.b16 %v293
    %v330 = vunpack.c.l.b16 %v294
    %v331 = vunpack.c.l.b16 %v295
    %v332 = vunpack.c.l.b16 %v296
    %v333 = vunpack.c.l.b16 %v297
    %v334 = vunpack.c.l.b16 %v298
    %v335 = vunpack.c.l.b16 %v299
    %v336 = vunpack.c.l.b16 %v300
    %v337 = vunpack.c.l.b16 %v301
    %v338 = vunpack.c.l.b16 %v302
    %v339 = vunpack.c.l.b16 %v303
    %v340 = vpack.c.b16 %v325, %v324
    %v341 = vpack.c.b16 %v327, %v326
    %v342 = vpack.c.b16 %v329, %v328
    %v343 = vpack.c.b16 %v331, %v330
    %v344 = vpack.c.b16 %v333, %v332
    %v345 = vpack.c.b16 %v335, %v334
    %v346 = vpack.c.b16 %v337, %v336
    %v347 = vpack.c.b16 %v339, %v338
    %356 = vmatpush.bf16.msra.mxu0 %v347
    %357 = vmatpush.bf16.msra.mxu0 %v346
    %358 = vmatpush.bf16.msra.mxu0 %v345
    %359 = vmatpush.bf16.msra.mxu0 %v344
    %360 = vmatpush.bf16.msra.mxu0 %v343
    %361 = vmatpush.bf16.msra.mxu0 %v342
    %362 = vmatpush.bf16.msra.mxu0 %v341
    %363 = vmatpush.bf16.msra.mxu0 %v340
    %364 = vmatmul.bf16.gmra.mxu0 %v287
    %v365 = vpop.f32.mrf.mxu0
    %v366 = vadd.f32 %v306, %v365
    %v367 = vpop.f32.mrf.mxu0
    %368 = vdwg.mxu0
    %v369 = vmax.f32 %v366, 0.0
    %v370 = vpack.c.bf16 %v369, %v369
    %s371 = scalar_lea.vmem [#allocation8], 64
    %v372 = vld [vmem:[%s371] sm:$0xf]
    %v373 = vld [vmem:[%s371 + $0x4] sm:$0xf]
    %v374 = vld [vmem:[%s371 + $0x8] sm:$0xf]
    %v375 = vld [vmem:[%s371 + $0xc] sm:$0xf]
    %v376 = vld [vmem:[%s371 + $0x10] sm:$0xf]
    %v377 = vld [vmem:[%s371 + $0x14] sm:$0xf]
    %v378 = vld [vmem:[%s371 + $0x18] sm:$0xf]
    %v379 = vld [vmem:[%s371 + $0x1c] sm:$0xf]
    %v380 = vld [vmem:[%s371 + $0x20] sm:$0xf]
    %v381 = vld [vmem:[%s371 + $0x24] sm:$0xf]
    %v382 = vld [vmem:[%s371 + $0x28] sm:$0xf]
    %v383 = vld [vmem:[%s371 + $0x2c] sm:$0xf]
    %v384 = vld [vmem:[%s371 + $0x30] sm:$0xf]
    %v385 = vld [vmem:[%s371 + $0x34] sm:$0xf]
    %v386 = vld [vmem:[%s371 + $0x38] sm:$0xf]
    %v387 = vld [vmem:[%s371 + $0x3c] sm:$0xf]
    %s388 = scalar_lea.vmem [#allocation10], 1
    %v389 = vld [vmem:[%s388] sm:$0x1]
    %v391 = vperm.slane %v389, 0
    %v409 = vunpack.c.l.b16 %v372
    %v410 = vunpack.c.l.b16 %v373
    %v411 = vunpack.c.l.b16 %v374
    %v412 = vunpack.c.l.b16 %v375
    %v413 = vunpack.c.l.b16 %v376
    %v414 = vunpack.c.l.b16 %v377
    %v415 = vunpack.c.l.b16 %v378
    %v416 = vunpack.c.l.b16 %v379
    %v417 = vunpack.c.l.b16 %v380
    %v418 = vunpack.c.l.b16 %v381
    %v419 = vunpack.c.l.b16 %v382
    %v420 = vunpack.c.l.b16 %v383
    %v421 = vunpack.c.l.b16 %v384
    %v422 = vunpack.c.l.b16 %v385
    %v423 = vunpack.c.l.b16 %v386
    %v424 = vunpack.c.l.b16 %v387
    %v425 = vpack.c.b16 %v410, %v409
    %v426 = vpack.c.b16 %v412, %v411
    %v427 = vpack.c.b16 %v414, %v413
    %v428 = vpack.c.b16 %v416, %v415
    %v429 = vpack.c.b16 %v418, %v417
    %v430 = vpack.c.b16 %v420, %v419
    %v431 = vpack.c.b16 %v422, %v421
    %v432 = vpack.c.b16 %v424, %v423
    %441 = vmatpush.bf16.msra.mxu0 %v432
    %442 = vmatpush.bf16.msra.mxu0 %v431
    %443 = vmatpush.bf16.msra.mxu0 %v430
    %444 = vmatpush.bf16.msra.mxu0 %v429
    %445 = vmatpush.bf16.msra.mxu0 %v428
    %446 = vmatpush.bf16.msra.mxu0 %v427
    %447 = vmatpush.bf16.msra.mxu0 %v426
    %448 = vmatpush.bf16.msra.mxu0 %v425
    %449 = vmatmul.bf16.gmra.mxu0 %v370
    %v450 = vpop.f32.mrf.mxu0
    %v451 = vadd.f32 %v391, %v450
    %v452 = vpop.f32.mrf.mxu0
    %453 = vdwg.mxu0
    %v454 = vmax.f32 %v451, 0.0
    %v455 = vpack.c.bf16 %v454, %v454
    %s456 = scalar_lea.vmem [#allocation8], 128
    %v457 = vld [vmem:[%s456] sm:$0xf]
    %v458 = vld [vmem:[%s456 + $0x4] sm:$0xf]
    %v459 = vld [vmem:[%s456 + $0x8] sm:$0xf]
    %v460 = vld [vmem:[%s456 + $0xc] sm:$0xf]
    %v461 = vld [vmem:[%s456 + $0x10] sm:$0xf]
    %v462 = vld [vmem:[%s456 + $0x14] sm:$0xf]
    %v463 = vld [vmem:[%s456 + $0x18] sm:$0xf]
    %v464 = vld [vmem:[%s456 + $0x1c] sm:$0xf]
    %v465 = vld [vmem:[%s456 + $0x20] sm:$0xf]
    %v466 = vld [vmem:[%s456 + $0x24] sm:$0xf]
    %v467 = vld [vmem:[%s456 + $0x28] sm:$0xf]
    %v468 = vld [vmem:[%s456 + $0x2c] sm:$0xf]
    %v469 = vld [vmem:[%s456 + $0x30] sm:$0xf]
    %v470 = vld [vmem:[%s456 + $0x34] sm:$0xf]
    %v471 = vld [vmem:[%s456 + $0x38] sm:$0xf]
    %v472 = vld [vmem:[%s456 + $0x3c] sm:$0xf]
    %s473 = scalar_lea.vmem [#allocation10], 2
    %v474 = vld [vmem:[%s473] sm:$0x1]
    %v476 = vperm.slane %v474, 0
    %v494 = vunpack.c.l.b16 %v457
    %v495 = vunpack.c.l.b16 %v458
    %v496 = vunpack.c.l.b16 %v459
    %v497 = vunpack.c.l.b16 %v460
    %v498 = vunpack.c.l.b16 %v461
    %v499 = vunpack.c.l.b16 %v462
    %v500 = vunpack.c.l.b16 %v463
    %v501 = vunpack.c.l.b16 %v464
    %v502 = vunpack.c.l.b16 %v465
    %v503 = vunpack.c.l.b16 %v466
    %v504 = vunpack.c.l.b16 %v467
    %v505 = vunpack.c.l.b16 %v468
    %v506 = vunpack.c.l.b16 %v469
    %v507 = vunpack.c.l.b16 %v470
    %v508 = vunpack.c.l.b16 %v471
    %v509 = vunpack.c.l.b16 %v472
    %v510 = vpack.c.b16 %v495, %v494
    %v511 = vpack.c.b16 %v497, %v496
    %v512 = vpack.c.b16 %v499, %v498
    %v513 = vpack.c.b16 %v501, %v500
    %v514 = vpack.c.b16 %v503, %v502
    %v515 = vpack.c.b16 %v505, %v504
    %v516 = vpack.c.b16 %v507, %v506
    %v517 = vpack.c.b16 %v509, %v508
    %526 = vmatpush.bf16.msra.mxu0 %v517
    %527 = vmatpush.bf16.msra.mxu0 %v516
    %528 = vmatpush.bf16.msra.mxu0 %v515
    %529 = vmatpush.bf16.msra.mxu0 %v514
    %530 = vmatpush.bf16.msra.mxu0 %v513
    %531 = vmatpush.bf16.msra.mxu0 %v512
    %532 = vmatpush.bf16.msra.mxu0 %v511
    %533 = vmatpush.bf16.msra.mxu0 %v510
    %534 = vmatmul.bf16.gmra.mxu0 %v455
    %v535 = vpop.f32.mrf.mxu0
    %v536 = vadd.f32 %v476, %v535
    %v537 = vpop.f32.mrf.mxu0
    %538 = vdwg.mxu0
    %v539 = vmax.f32 %v536, 0.0
    %v540 = vpack.c.bf16 %v539, %v539
    %s541 = scalar_lea.vmem [#allocation8], 192
    %v542 = vld [vmem:[%s541] sm:$0xf]
    %v543 = vld [vmem:[%s541 + $0x4] sm:$0xf]
    %v544 = vld [vmem:[%s541 + $0x8] sm:$0xf]
    %v545 = vld [vmem:[%s541 + $0xc] sm:$0xf]
    %v546 = vld [vmem:[%s541 + $0x10] sm:$0xf]
    %v547 = vld [vmem:[%s541 + $0x14] sm:$0xf]
    %v548 = vld [vmem:[%s541 + $0x18] sm:$0xf]
    %v549 = vld [vmem:[%s541 + $0x1c] sm:$0xf]
    %v550 = vld [vmem:[%s541 + $0x20] sm:$0xf]
    %v551 = vld [vmem:[%s541 + $0x24] sm:$0xf]
    %v552 = vld [vmem:[%s541 + $0x28] sm:$0xf]
    %v553 = vld [vmem:[%s541 + $0x2c] sm:$0xf]
    %v554 = vld [vmem:[%s541 + $0x30] sm:$0xf]
    %v555 = vld [vmem:[%s541 + $0x34] sm:$0xf]
    %v556 = vld [vmem:[%s541 + $0x38] sm:$0xf]
    %v557 = vld [vmem:[%s541 + $0x3c] sm:$0xf]
    %s558 = scalar_lea.vmem [#allocation10], 3
    %v559 = vld [vmem:[%s558] sm:$0x1]
    %v561 = vperm.slane %v559, 0
    %v579 = vunpack.c.l.b16 %v542
    %v580 = vunpack.c.l.b16 %v543
    %v581 = vunpack.c.l.b16 %v544
    %v582 = vunpack.c.l.b16 %v545
    %v583 = vunpack.c.l.b16 %v546
    %v584 = vunpack.c.l.b16 %v547
    %v585 = vunpack.c.l.b16 %v548
    %v586 = vunpack.c.l.b16 %v549
    %v587 = vunpack.c.l.b16 %v550
    %v588 = vunpack.c.l.b16 %v551
    %v589 = vunpack.c.l.b16 %v552
    %v590 = vunpack.c.l.b16 %v553
    %v591 = vunpack.c.l.b16 %v554
    %v592 = vunpack.c.l.b16 %v555
    %v593 = vunpack.c.l.b16 %v556
    %v594 = vunpack.c.l.b16 %v557
    %v595 = vpack.c.b16 %v580, %v579
    %v596 = vpack.c.b16 %v582, %v581
    %v597 = vpack.c.b16 %v584, %v583
    %v598 = vpack.c.b16 %v586, %v585
    %v599 = vpack.c.b16 %v588, %v587
    %v600 = vpack.c.b16 %v590, %v589
    %v601 = vpack.c.b16 %v592, %v591
    %v602 = vpack.c.b16 %v594, %v593
    %611 = vmatpush.bf16.msra.mxu0 %v602
    %612 = vmatpush.bf16.msra.mxu0 %v601
    %613 = vmatpush.bf16.msra.mxu0 %v600
    %614 = vmatpush.bf16.msra.mxu0 %v599
    %615 = vmatpush.bf16.msra.mxu0 %v598
    %616 = vmatpush.bf16.msra.mxu0 %v597
    %617 = vmatpush.bf16.msra.mxu0 %v596
    %618 = vmatpush.bf16.msra.mxu0 %v595
    %619 = vmatmul.bf16.gmra.mxu0 %v540
    %v620 = vpop.f32.mrf.mxu0
    %v621 = vadd.f32 %v561, %v620
    %v622 = vpop.f32.mrf.mxu0
    %623 = vdwg.mxu0
    %v624 = vmax.f32 %v621, 0.0
    %625 = vst [vmem:[#allocation11] sm:$0xff] %v624
    // Predicated region
    $region42: #{tpu_custom_call.1} parent=1 // pred_check
      _
    $region43: #{tpu_custom_call.1} parent=1 // pred_check_branch
      %627 = sbr.rel (0) target = $region45
    $region44: #{tpu_custom_call.1} parent=1 // pred_region
      %629 = vsyncadd [#allocation4], 0
      %s631 = sshll.u32 [#allocation11], 4
      %s632 = int_to_ptr.vmem [resolvable:$true] %s631
      %s633 = sshll.u32 %s5, 4
      %s634 = int_to_ptr.hbm [resolvable:$true] %s633
      %636 = dma.vmem_to_hbm [thread:$0]  %s632, 128, %s634, [#allocation4]
    $region45: #{tpu_custom_call.1} parent=1 // pred_fallthru
      _
    // Predicated region
    $region46: #{tpu_custom_call.1} parent=1 // pred_check
      _
    $region47: #{tpu_custom_call.1} parent=1 // pred_check_branch
      %638 = sbr.rel (0) target = $region49
    $region48: #{tpu_custom_call.1} parent=1 // pred_region
      %640 = dma.done [#allocation4], 128
    $region49: #{tpu_custom_call.1} parent=1 // pred_fallthru
      _
    %641 = vsyncpa [#allocation3], 1
    %642 = vsyncpa [#allocation6], 1
    %643 = vsyncpa [#allocation9], 1
    %644 = vsyncpa [#allocation4], 1

</llo_original>
